<compile_context>
chip_gen: v5e
topology: v5e:2x2
jax: 0.10.0
libtpu: 0.0.40
codegen_flags: <defaults>
</compile_context>

<pallas_src>
import jax
import jax.numpy as jnp
from jax.experimental import pallas as pl
from jax.experimental.pallas import tpu as pltpu

MINIBATCH = 256
_SUBLANE = 8  # f32 sublane granule


def _round_up(x, m):
    return (x + m - 1) // m * m


def _label_resize_kernel(lbs_ref, o_ref):
    # lbs_ref: (rows, 1)        f32 in VMEM -- labels already padded/clamped.
    # o_ref  : (rows, MINIBATCH) f32 output slab in VMEM.
    # Single lane-broadcast + one unmasked full store.
    o_ref[...] = jnp.broadcast_to(lbs_ref[...], o_ref.shape)


def instance_label_resize_flat(x, need_backprop, minibatch=MINIBATCH):
    """Lane-dense (R,) float32 per-RoI domain labels."""
    R = x.shape[0]                                    # feats.shape[0]
    if R == 0:                                        # guard: no zero-row pallas output
        return jnp.ones((0,), dtype=jnp.float32)

    lbs = need_backprop.reshape(-1).astype(jnp.float32)
    B = lbs.shape[0]
    num_tiles = pl.cdiv(R, minibatch)                 # static Python int
    rows = _round_up(num_tiles, _SUBLANE)             # sublane-aligned slab height

    # Pad/truncate labels to exactly `rows`:
    #  - rows beyond the provided labels keep the np.ones default of 1.0,
    #  - labels beyond the available RoI tiles are discarded (NumPy slice clamp).
    n = min(B, num_tiles)
    lbs_pad = jnp.concatenate(
        [lbs[:n], jnp.ones((rows - n,), dtype=jnp.float32)]
    )[:, None]                                        # (rows, 1)

    out2d = pl.pallas_call(
        _label_resize_kernel,
        out_shape=jax.ShapeDtypeStruct((rows, minibatch), jnp.float32),
        in_specs=[pl.BlockSpec(memory_space=pltpu.MemorySpace.VMEM)],
        out_specs=pl.BlockSpec(memory_space=pltpu.MemorySpace.VMEM),
        cost_estimate=pl.CostEstimate(
            flops=0,
            transcendentals=0,
            bytes_accessed=4 * rows * minibatch + 4 * rows,
        ),
    )(lbs_pad)

    # Row-major (rows, minibatch) flattens exactly into per-RoI order; trim the
    # padded tail. Keep it lane-dense (no trailing singleton dim here).
    return out2d.reshape(rows * minibatch)[:R]


def instance_label_resize(x, need_backprop, minibatch=MINIBATCH):
    """Pallas implementation of InstanceLabelResizeLayer.forward -> (R, 1) f32."""
    flat = instance_label_resize_flat(x, need_backprop, minibatch)
    # Singleton dim added only at the module boundary to match PyTorch output.
    return flat[:, None]


def _reference(x, need_backprop, minibatch=MINIBATCH):
    """Pure-numpy reference mirroring the PyTorch forward."""
    import numpy as np
    feats = jax.device_get(x)
    lbs = jax.device_get(need_backprop).reshape(-1)
    resized = np.ones((feats.shape[0], 1), dtype=np.float32)
    for i in range(lbs.shape[0]):
        resized[i * minibatch:(i + 1) * minibatch] = lbs[i]
    return resized


if __name__ == "__main__":
    key = jax.random.PRNGKey(0)
    kx, kl = jax.random.split(key)

    B = 2                                # number of images
    R = B * MINIBATCH                    # number of RoI instances (2 * 256)
    C = 8                                # small feature dim (values unused)

    x = jax.random.normal(kx, (R, C), dtype=jnp.float32)
    # per-image domain labels (0.0 / 1.0), like need_backprop in DA-Faster-RCNN
    need_backprop = jax.random.bernoulli(kl, 0.5, (B,)).astype(jnp.float32)

    y = jax.block_until_ready(instance_label_resize(x, need_backprop))
    ref = _reference(x, need_backprop)
    assert y.shape == (R, 1) and y.dtype == jnp.float32
    assert jnp.allclose(y, jnp.asarray(ref)), "mismatch vs reference (exact tiles)"

    # Partial last tile (R not a multiple of 256).
    R2 = 300
    x2 = jax.random.normal(kx, (R2, C), dtype=jnp.float32)
    y2 = jax.block_until_ready(instance_label_resize(x2, need_backprop))
    assert y2.shape == (R2, 1)
    assert jnp.allclose(y2, jnp.asarray(_reference(x2, need_backprop))), \
        "mismatch vs reference (partial tile)"

    # More labels than RoI tiles (extra labels clamped away, as numpy does).
    R3 = 100
    x3 = jax.random.normal(kx, (R3, C), dtype=jnp.float32)
    y3 = jax.block_until_ready(instance_label_resize(x3, need_backprop))
    assert jnp.allclose(y3, jnp.asarray(_reference(x3, need_backprop))), \
        "mismatch vs reference (clamped labels)"

    # Lane-dense flat variant agrees with the (R,1) form.
    yf = jax.block_until_ready(instance_label_resize_flat(x, need_backprop))
    assert yf.shape == (R,)
    assert jnp.allclose(yf[:, None], y), "flat vs column mismatch"

    # R == 0 edge case.
    x0 = jnp.zeros((0, C), dtype=jnp.float32)
    y0 = jax.block_until_ready(instance_label_resize(x0, need_backprop))
    assert y0.shape == (0, 1)

    print("KERNEL_OK")
</pallas_src>

<mosaic_0001>
module attributes {stable_mosaic.version = 11 : i64} {
  func.func @_label_resize_kernel(%arg0: memref<8x1xf32, #tpu.memory_space<vmem>>, %arg1: memref<8x256xf32, #tpu.memory_space<vmem>>) attributes {dimension_semantics = [], scalar_prefetch = 0 : i64, scratch_operands = 0 : i64, tpu.core_type = #tpu.core_type<tc>} {
    %c0 = arith.constant 0 : index
    %c0_0 = arith.constant 0 : index
    %0 = vector.load %arg0[%c0, %c0_0] : memref<8x1xf32, #tpu.memory_space<vmem>>, vector<8x1xf32>
    %1 = vector.shape_cast %0 : vector<8x1xf32> to vector<8x1xf32>
    %2 = vector.broadcast %1 : vector<8x1xf32> to vector<8x256xf32>
    %c0_1 = arith.constant 0 : index
    %c0_2 = arith.constant 0 : index
    %3 = vector.load %arg1[%c0_1, %c0_2] : memref<8x256xf32, #tpu.memory_space<vmem>>, vector<8x256xf32>
    tpu.vector_store %arg1[%c0_1, %c0_2], %2 {strides = array<i32>} : memref<8x256xf32, #tpu.memory_space<vmem>>, vector<8x256xf32>,
    return
  }
}

</mosaic_0001>

<llo_original>
// kernel: tpu_custom_call.1
$region0: #{tpu_custom_call.1}
  #allocation0 [shape = 'u32[]', space=smem, size = 0x4, offset = 0x4, fixed_abs, tag = 'smem constant byte address 0x4 - core index']
  #allocation1 [shape = 'u32[72,128]{1,0:T(1,128)}', space=vmem, size = 0x9000, scoped, tag = 'internal scratch']
  %s0 = inlined_call_operand.vmem [shape: f32[8,1], index: 0, kind: input, shape index: {}]
  %s1 = inlined_call_operand.hbm [shape: f32[8,256], index: 1, kind: output, shape index: {}]
  %s2 = sld [smem:[#allocation0]]
  $region14: #{tpu_custom_call.1} parent=0
    _
  %s4 = ssub.s32 1, %s2
  %s5 = scalar_select 0, %s4, %s2
  $region1: #{tpu_custom_call.1} parent=0
    #allocation2 [shape = 'u8[8192]{0}', space=vmem, size = 0x2000, scoped, tag = 'output window, operand 0, single buffered']
    #allocation3 [shape = 's32[1]{0}', space=sflag, size = 0x4, scoped, tag = 'scoped memory for tpu_custom_call.1']
    %6 = vsyncpa [#allocation3], 0
    // Predicated region
    $region2: #{tpu_custom_call.1} parent=1 // pred_check
      _
    $region3: #{tpu_custom_call.1} parent=1 // pred_check_branch
      %8 = sbr.rel (0) target = $region5
    $region4: #{tpu_custom_call.1} parent=1 // pred_region
      _
    $region5: #{tpu_custom_call.1} parent=1 // pred_fallthru
      _
    %v9 = vld [vmem:[%s0] sm:$0xff]
    %11 = vset.pattern.permute.xlu0 0
    %12 = vperm.xlu0 %11, %v9
    %v13 = vpop.permute.xlu0 %12
    %15 = vst [vmem:[#allocation2] sm:$0xff] %v13
    %16 = vst [vmem:[#allocation2 + $0x8] sm:$0xff] %v13
    // Predicated region
    $region6: #{tpu_custom_call.1} parent=1 // pred_check
      _
    $region7: #{tpu_custom_call.1} parent=1 // pred_check_branch
      %18 = sbr.rel (0) target = $region9
    $region8: #{tpu_custom_call.1} parent=1 // pred_region
      %20 = vsyncadd [#allocation3], 0
      %s22 = sshll.u32 [#allocation2], 4
      %s23 = int_to_ptr.vmem [resolvable:$true] %s22
      %s24 = sshll.u32 %s1, 4
      %s25 = int_to_ptr.hbm [resolvable:$true] %s24
      %27 = dma.vmem_to_hbm [thread:$0]  %s23, 256, %s25, [#allocation3]
    $region9: #{tpu_custom_call.1} parent=1 // pred_fallthru
      _
    // Predicated region
    $region10: #{tpu_custom_call.1} parent=1 // pred_check
      _
    $region11: #{tpu_custom_call.1} parent=1 // pred_check_branch
      %29 = sbr.rel (0) target = $region13
    $region12: #{tpu_custom_call.1} parent=1 // pred_region
      %31 = dma.done [#allocation3], 256
    $region13: #{tpu_custom_call.1} parent=1 // pred_fallthru
      _
    %32 = vsyncpa [#allocation3], 1

</llo_original>
